<compile_context>
chip_gen: v5e
topology: v5e:2x2
jax: 0.10.0
libtpu: 0.0.40
codegen_flags: <defaults>
</compile_context>

<pallas_src>
import jax
import jax.numpy as jnp
from jax.experimental import pallas as pl
from jax.experimental.pallas import tpu as pltpu


def _round_up(x, m):
    return ((x + m - 1) // m) * m


def _choose_tiling(B, max_tile=4096):
    """Pick (tile_b, num_tiles): tile_b a multiple of 128, padding bounded,
    and an even number of tiles for large batches (v7x 2-TensorCore balance)."""
    if B <= max_tile:
        num_tiles = 2 if B >= 1024 else 1
    else:
        num_tiles = pl.cdiv(B, max_tile)
        num_tiles += num_tiles % 2          # even -> balanced across 2 TCs
    tile_b = _round_up(pl.cdiv(B, num_tiles), 128)
    return tile_b, num_tiles


def _mlp_kernel(x_ref, w1_ref, b1_ref, w2_ref, b2_ref,
                w3_ref, b3_ref, w4_ref, b4_ref, o_ref):
    # fc1 + ReLU   (dropout1 = identity in eval mode)
    # x tile is [tile_b, D]; contract on D so the batch lands on the lane dim:
    # result [64, tile_b] == (x @ W1^T)^T.  MXU does the matmul; the operand
    # re-layout rides the otherwise-idle XLU slot.
    h = jax.lax.dot_general(
        w1_ref[...], x_ref[...],
        dimension_numbers=(((1,), (1,)), ((), ())),
        preferred_element_type=jnp.float32)
    h = jnp.maximum(h + b1_ref[...], 0.0)                      # [64, tile_b] f32

    # fc2 + ReLU   (dropout2 = identity in eval mode)
    h = jnp.dot(w2_ref[...], h.astype(w2_ref.dtype),
                preferred_element_type=jnp.float32)
    h = jnp.maximum(h + b2_ref[...], 0.0)                      # [64, tile_b] f32

    # fc3 + ReLU   (dropout3 = identity in eval mode)
    h = jnp.dot(w3_ref[...], h.astype(w3_ref.dtype),
                preferred_element_type=jnp.float32)
    h = jnp.maximum(h + b3_ref[...], 0.0)                      # [32, tile_b] f32

    # fc4 (out_features == 1): sublane reduction into a lane-dense [1, tile_b]
    # row (XLU) instead of an M/N=1 MXU matmul -> unmasked full-lane store.
    o = jnp.sum(h * w4_ref[...], axis=0, keepdims=True)        # [1, tile_b]
    o_ref[...] = (o + b4_ref[...]).astype(o_ref.dtype)


def house_prices_forward(x, params, *, max_tile=4096, use_bf16=True):
    """Fused MLP forward. x: [B, input_size] float32 -> [B, 1] float32."""
    (w1, b1), (w2, b2), (w3, b3), (w4, b4) = params
    B, D = x.shape

    tile_b, num_tiles = _choose_tiling(B, max_tile)
    B_pad = tile_b * num_tiles

    cdt = jnp.bfloat16 if use_bf16 else jnp.float32
    # Natural [B, D] layout (no HBM transpose); cast + small zero-pad fuse
    # into one pass under jit.  Padded rows produce garbage that is sliced off.
    x_in = jnp.pad(x.astype(cdt), ((0, B_pad - B), (0, 0)))     # [B_pad, D]

    # HBM-resident matmul operands narrowed to bf16; biases stay f32.
    w1c = w1.astype(cdt)
    w2c = w2.astype(cdt)
    w3c = w3.astype(cdt)
    # Biases as [out, 1] columns so they broadcast over the lane (batch) dim;
    # w4 as an f32 [in, 1] column for the sublane-reduction final layer.
    b1c = b1.reshape(-1, 1).astype(jnp.float32)
    b2c = b2.reshape(-1, 1).astype(jnp.float32)
    b3c = b3.reshape(-1, 1).astype(jnp.float32)
    b4c = b4.reshape(-1, 1).astype(jnp.float32)                 # [1, 1]
    w4c = w4.reshape(-1, 1).astype(jnp.float32)                 # [32, 1]

    # Constant-index blocks: weights/biases are fetched once and stay resident
    # in VMEM across all grid steps.
    const = lambda a: pl.BlockSpec(a.shape, lambda i: (0, 0))

    grid_spec = pl.GridSpec(
        grid=(num_tiles,),
        in_specs=[
            # NOTE: for v5e with moderate tiles (<=1024), pipeline_mode=
            # pl.Buffered(3) on this spec can hide the exposed x DMA.
            pl.BlockSpec((tile_b, D), lambda i: (i, 0)),        # x row tile
            const(w1c), const(b1c),
            const(w2c), const(b2c),
            const(w3c), const(b3c),
            const(w4c), const(b4c),
        ],
        out_specs=pl.BlockSpec((1, tile_b), lambda i: (0, i)),  # lane-dense row
    )

    out_t = pl.pallas_call(
        _mlp_kernel,
        out_shape=jax.ShapeDtypeStruct((1, B_pad), jnp.float32),
        grid_spec=grid_spec,
        compiler_params=pltpu.CompilerParams(
            dimension_semantics=("parallel",)),
    )(x_in, w1c, b1c, w2c, b2c, w3c, b3c, w4c, b4c)

    return out_t[0, :B].reshape(B, 1)


def init_params(key, input_size):
    """Deterministic init matching PyTorch Linear default (uniform +-1/sqrt(fan_in)).
    Weights stored in PyTorch layout [out, in]."""
    dims = [(64, input_size), (64, 64), (32, 64), (1, 32)]
    params = []
    for (fan_out, fan_in) in dims:
        key, kw, kb = jax.random.split(key, 3)
        bound = 1.0 / jnp.sqrt(float(fan_in))
        w = jax.random.uniform(kw, (fan_out, fan_in), jnp.float32, -bound, bound)
        b = jax.random.uniform(kb, (fan_out,), jnp.float32, -bound, bound)
        params.append((w, b))
    return params


def reference_forward(x, params, use_bf16=True):
    """Plain-JAX reference with the same operand rounding as the kernel
    (bf16 matmul operands, f32 accumulate/bias/ReLU; dropout = identity)."""
    (w1, b1), (w2, b2), (w3, b3), (w4, b4) = params
    cdt = jnp.bfloat16 if use_bf16 else jnp.float32
    f32 = jnp.float32
    h = jnp.dot(x.astype(cdt), w1.astype(cdt).T, preferred_element_type=f32)
    h = jnp.maximum(h + b1, 0.0)
    h = jnp.dot(h.astype(cdt), w2.astype(cdt).T, preferred_element_type=f32)
    h = jnp.maximum(h + b2, 0.0)
    h = jnp.dot(h.astype(cdt), w3.astype(cdt).T, preferred_element_type=f32)
    h = jnp.maximum(h + b3, 0.0)
    return jnp.dot(h, w4.astype(f32).T) + b4


def reference_forward_f32(x, params):
    """Pure-f32 reference of the PyTorch module (eval mode)."""
    (w1, b1), (w2, b2), (w3, b3), (w4, b4) = params
    h = jnp.maximum(x @ w1.T + b1, 0.0)
    h = jnp.maximum(h @ w2.T + b2, 0.0)
    h = jnp.maximum(h @ w3.T + b3, 0.0)
    return h @ w4.T + b4


if __name__ == "__main__":
    key = jax.random.PRNGKey(0)
    input_size = 32

    kx1, kx2, kx3, kp = jax.random.split(key, 4)
    params = init_params(kp, input_size)

    fwd = jax.jit(lambda x, p: house_prices_forward(x, p))

    def check(x, name):
        out = jax.block_until_ready(fwd(x, params))
        ref = reference_forward(x, params)          # bf16-matched reference
        ref_f32 = reference_forward_f32(x, params)  # semantic (f32) reference
        assert out.shape == (x.shape[0], 1), name
        assert jnp.allclose(out, ref, atol=2e-3, rtol=2e-3), f"mismatch vs bf16 ref ({name})"
        assert jnp.allclose(out, ref_f32, atol=5e-2, rtol=5e-2), f"mismatch vs f32 ref ({name})"

    # Case 1: batch not a multiple of 128 -> single padded tile (384 rows).
    check(jax.random.normal(kx1, (300, input_size), jnp.float32), "B=300")
    # Case 2: tiny batch -> single 128-row padded tile.
    check(jax.random.normal(kx2, (8, input_size), jnp.float32), "B=8")
    # Case 3: larger batch -> even (2) tile count, small padding (B_pad=2560).
    check(jax.random.normal(kx3, (2500, input_size), jnp.float32), "B=2500")

    # TODO(synk): dropout layers are identity in eval mode; training-mode dropout
    # (with pltpu.prng_random_bits) is intentionally not modeled here.
    print("KERNEL_OK")
</pallas_src>

<mosaic_0001>
module attributes {stable_mosaic.version = 11 : i64} {
  func.func @_mlp_kernel(%arg0: i32, %arg1: memref<384x32xbf16, #tpu.memory_space<vmem>>, %arg2: memref<64x32xbf16, #tpu.memory_space<vmem>>, %arg3: memref<64x1xf32, #tpu.memory_space<vmem>>, %arg4: memref<64x64xbf16, #tpu.memory_space<vmem>>, %arg5: memref<64x1xf32, #tpu.memory_space<vmem>>, %arg6: memref<32x64xbf16, #tpu.memory_space<vmem>>, %arg7: memref<32x1xf32, #tpu.memory_space<vmem>>, %arg8: memref<32x1xf32, #tpu.memory_space<vmem>>, %arg9: memref<1x1xf32, #tpu.memory_space<vmem>>, %arg10: memref<1x384xf32, #tpu.memory_space<vmem>>) attributes {dimension_semantics = [#tpu.dimension_semantics<parallel>], iteration_bounds = array<i64: 1>, scalar_prefetch = 0 : i64, scratch_operands = 0 : i64, tpu.core_type = #tpu.core_type<tc>, window_params = [{transform_indices = @transform_0, window_bounds = array<i64: 384, 32>}, {pipeline_mode = #tpu.pipeline_mode<synchronous>, transform_indices = @transform_1, window_bounds = array<i64: 64, 32>}, {pipeline_mode = #tpu.pipeline_mode<synchronous>, transform_indices = @transform_2, window_bounds = array<i64: 64, 1>}, {pipeline_mode = #tpu.pipeline_mode<synchronous>, transform_indices = @transform_3, window_bounds = array<i64: 64, 64>}, {pipeline_mode = #tpu.pipeline_mode<synchronous>, transform_indices = @transform_4, window_bounds = array<i64: 64, 1>}, {pipeline_mode = #tpu.pipeline_mode<synchronous>, transform_indices = @transform_5, window_bounds = array<i64: 32, 64>}, {pipeline_mode = #tpu.pipeline_mode<synchronous>, transform_indices = @transform_6, window_bounds = array<i64: 32, 1>}, {pipeline_mode = #tpu.pipeline_mode<synchronous>, transform_indices = @transform_7, window_bounds = array<i64: 32, 1>}, {pipeline_mode = #tpu.pipeline_mode<synchronous>, transform_indices = @transform_8, window_bounds = array<i64: 1, 1>}, {transform_indices = @transform_9, window_bounds = array<i64: 1, 384>}]} {
    %c0 = arith.constant 0 : index
    %c0_0 = arith.constant 0 : index
    %0 = vector.load %arg2[%c0, %c0_0] : memref<64x32xbf16, #tpu.memory_space<vmem>>, vector<64x32xbf16>
    %c0_1 = arith.constant 0 : index
    %c0_2 = arith.constant 0 : index
    %1 = vector.load %arg1[%c0_1, %c0_2] : memref<384x32xbf16, #tpu.memory_space<vmem>>, vector<384x32xbf16>
    %cst = arith.constant dense<0.000000e+00> : vector<64x384xf32>
    %2 = tpu.matmul %0, %1, %cst {dimension_numbers = #tpu.dot_dimension_numbers<[1], [1], [0], [0], [0, 0, 1, 0], [], []>} : vector<64x32xbf16>, vector<384x32xbf16>, vector<64x384xf32> -> vector<64x384xf32>
    %c0_3 = arith.constant 0 : index
    %c0_4 = arith.constant 0 : index
    %3 = vector.load %arg3[%c0_3, %c0_4] : memref<64x1xf32, #tpu.memory_space<vmem>>, vector<64x1xf32>
    %4 = vector.broadcast %3 : vector<64x1xf32> to vector<64x384xf32>
    %5 = arith.addf %2, %4 : vector<64x384xf32>
    %cst_5 = arith.constant 0.000000e+00 : f32
    %6 = vector.broadcast %cst_5 : f32 to vector<64x384xf32>
    %7 = arith.maximumf %5, %6 : vector<64x384xf32>
    %c0_6 = arith.constant 0 : index
    %c0_7 = arith.constant 0 : index
    %8 = vector.load %arg4[%c0_6, %c0_7] : memref<64x64xbf16, #tpu.memory_space<vmem>>, vector<64x64xbf16>
    %9 = arith.truncf %7 : vector<64x384xf32> to vector<64x384xbf16>
    %cst_8 = arith.constant dense<0.000000e+00> : vector<64x384xf32>
    %10 = tpu.matmul %8, %9, %cst_8 {dimension_numbers = #tpu.dot_dimension_numbers<[1], [0], [0], [1], [0, 0, 1, 1], [], []>} : vector<64x64xbf16>, vector<64x384xbf16>, vector<64x384xf32> -> vector<64x384xf32>
    %c0_9 = arith.constant 0 : index
    %c0_10 = arith.constant 0 : index
    %11 = vector.load %arg5[%c0_9, %c0_10] : memref<64x1xf32, #tpu.memory_space<vmem>>, vector<64x1xf32>
    %12 = vector.broadcast %11 : vector<64x1xf32> to vector<64x384xf32>
    %13 = arith.addf %10, %12 : vector<64x384xf32>
    %cst_11 = arith.constant 0.000000e+00 : f32
    %14 = vector.broadcast %cst_11 : f32 to vector<64x384xf32>
    %15 = arith.maximumf %13, %14 : vector<64x384xf32>
    %c0_12 = arith.constant 0 : index
    %c0_13 = arith.constant 0 : index
    %16 = vector.load %arg6[%c0_12, %c0_13] : memref<32x64xbf16, #tpu.memory_space<vmem>>, vector<32x64xbf16>
    %17 = arith.truncf %15 : vector<64x384xf32> to vector<64x384xbf16>
    %cst_14 = arith.constant dense<0.000000e+00> : vector<32x384xf32>
    %18 = tpu.matmul %16, %17, %cst_14 {dimension_numbers = #tpu.dot_dimension_numbers<[1], [0], [0], [1], [0, 0, 1, 1], [], []>} : vector<32x64xbf16>, vector<64x384xbf16>, vector<32x384xf32> -> vector<32x384xf32>
    %c0_15 = arith.constant 0 : index
    %c0_16 = arith.constant 0 : index
    %19 = vector.load %arg7[%c0_15, %c0_16] : memref<32x1xf32, #tpu.memory_space<vmem>>, vector<32x1xf32>
    %20 = vector.broadcast %19 : vector<32x1xf32> to vector<32x384xf32>
    %21 = arith.addf %18, %20 : vector<32x384xf32>
    %cst_17 = arith.constant 0.000000e+00 : f32
    %22 = vector.broadcast %cst_17 : f32 to vector<32x384xf32>
    %23 = arith.maximumf %21, %22 : vector<32x384xf32>
    %c0_18 = arith.constant 0 : index
    %c0_19 = arith.constant 0 : index
    %24 = vector.load %arg8[%c0_18, %c0_19] : memref<32x1xf32, #tpu.memory_space<vmem>>, vector<32x1xf32>
    %25 = vector.broadcast %24 : vector<32x1xf32> to vector<32x384xf32>
    %26 = arith.mulf %23, %25 : vector<32x384xf32>
    %cst_20 = arith.constant dense<0.000000e+00> : vector<384xf32>
    %27 = vector.multi_reduction <add>, %26, %cst_20 [0] : vector<32x384xf32> to vector<384xf32>
    %28 = vector.shape_cast %27 : vector<384xf32> to vector<1x384xf32>
    %c0_21 = arith.constant 0 : index
    %c0_22 = arith.constant 0 : index
    %29 = vector.load %arg9[%c0_21, %c0_22] : memref<1x1xf32, #tpu.memory_space<vmem>>, vector<1x1xf32>
    %30 = vector.broadcast %29 : vector<1x1xf32> to vector<1x384xf32>
    %31 = arith.addf %28, %30 : vector<1x384xf32>
    %c0_23 = arith.constant 0 : index
    %c0_24 = arith.constant 0 : index
    %32 = vector.load %arg10[%c0_23, %c0_24] : memref<1x384xf32, #tpu.memory_space<vmem>>, vector<1x384xf32>
    tpu.vector_store %arg10[%c0_23, %c0_24], %31 {strides = array<i32>} : memref<1x384xf32, #tpu.memory_space<vmem>>, vector<1x384xf32>,
    return
  }
  func.func @transform_0(%arg0: i32) -> (i32, i32) {
    %c0_i32 = arith.constant 0 : i32
    %c0_i32_0 = arith.constant 0 : i32
    return %arg0, %c0_i32 : i32, i32
  }
  func.func @transform_1(%arg0: i32) -> (i32, i32) {
    %c0_i32 = arith.constant 0 : i32
    %c0_i32_0 = arith.constant 0 : i32
    %c0_i32_1 = arith.constant 0 : i32
    return %c0_i32, %c0_i32_0 : i32, i32
  }
  func.func @transform_2(%arg0: i32) -> (i32, i32) {
    %c0_i32 = arith.constant 0 : i32
    %c0_i32_0 = arith.constant 0 : i32
    %c0_i32_1 = arith.constant 0 : i32
    return %c0_i32, %c0_i32_0 : i32, i32
  }
  func.func @transform_3(%arg0: i32) -> (i32, i32) {
    %c0_i32 = arith.constant 0 : i32
    %c0_i32_0 = arith.constant 0 : i32
    %c0_i32_1 = arith.constant 0 : i32
    return %c0_i32, %c0_i32_0 : i32, i32
  }
  func.func @transform_4(%arg0: i32) -> (i32, i32) {
    %c0_i32 = arith.constant 0 : i32
    %c0_i32_0 = arith.constant 0 : i32
    %c0_i32_1 = arith.constant 0 : i32
    return %c0_i32, %c0_i32_0 : i32, i32
  }
  func.func @transform_5(%arg0: i32) -> (i32, i32) {
    %c0_i32 = arith.constant 0 : i32
    %c0_i32_0 = arith.constant 0 : i32
    %c0_i32_1 = arith.constant 0 : i32
    return %c0_i32, %c0_i32_0 : i32, i32
  }
  func.func @transform_6(%arg0: i32) -> (i32, i32) {
    %c0_i32 = arith.constant 0 : i32
    %c0_i32_0 = arith.constant 0 : i32
    %c0_i32_1 = arith.constant 0 : i32
    return %c0_i32, %c0_i32_0 : i32, i32
  }
  func.func @transform_7(%arg0: i32) -> (i32, i32) {
    %c0_i32 = arith.constant 0 : i32
    %c0_i32_0 = arith.constant 0 : i32
    %c0_i32_1 = arith.constant 0 : i32
    return %c0_i32, %c0_i32_0 : i32, i32
  }
  func.func @transform_8(%arg0: i32) -> (i32, i32) {
    %c0_i32 = arith.constant 0 : i32
    %c0_i32_0 = arith.constant 0 : i32
    %c0_i32_1 = arith.constant 0 : i32
    return %c0_i32, %c0_i32_0 : i32, i32
  }
  func.func @transform_9(%arg0: i32) -> (i32, i32) {
    %c0_i32 = arith.constant 0 : i32
    %c0_i32_0 = arith.constant 0 : i32
    return %c0_i32, %arg0 : i32, i32
  }
}

</mosaic_0001>

<llo_original>
// kernel: _lambda_.1
$region0: #{_lambda_.1}
  #allocation0 [shape = 'u32[]', space=smem, size = 0x4, offset = 0x4, fixed_abs, tag = 'smem constant byte address 0x4 - core index']
  #allocation1 [shape = 'u32[72,128]{1,0:T(1,128)}', space=vmem, size = 0x9000, scoped, tag = 'internal scratch']
  #allocation2 [shape = 'f32[1,1]{1,0:T(1,128)S(1)}', space=vmem, size = 0x200, scoped, tag = 'scoped memory for _lambda_.1']
  %s0 = inlined_call_operand.vmem [shape: bf16[384,32], index: 0, kind: input, shape index: {}]
  %s1 = inlined_call_operand.vmem [shape: bf16[64,32], index: 1, kind: input, shape index: {}]
  %s2 = inlined_call_operand.vmem [shape: f32[64,1], index: 2, kind: input, shape index: {}]
  %s3 = inlined_call_operand.vmem [shape: bf16[64,64], index: 3, kind: input, shape index: {}]
  %s4 = inlined_call_operand.vmem [shape: f32[64,1], index: 4, kind: input, shape index: {}]
  %s5 = inlined_call_operand.vmem [shape: bf16[32,64], index: 5, kind: input, shape index: {}]
  %s6 = inlined_call_operand.vmem [shape: f32[32,1], index: 6, kind: input, shape index: {}]
  %s7 = inlined_call_operand.vmem [shape: f32[32,1], index: 7, kind: input, shape index: {}]
  %s8 = inlined_call_operand.<no memory space> [shape: f32[1,1], index: 8, kind: input, shape index: {}]
  %s9 = inlined_call_operand.vmem [shape: f32[1,384], index: 9, kind: output, shape index: {}]
  %s10 = sld [smem:[#allocation0]]
  $region46: #{_lambda_.1} parent=0
    _
  %s12 = ssub.s32 1, %s10
  %s13 = scalar_select 0, %s12, %s10
  %v14 = vstv %s8
  %15 = vst [vmem:[#allocation2] sm:$0x1] %v14
  // Predicated region
  $region2: #{_lambda_.1} parent=0 // pred_check
    _
  $region3: #{_lambda_.1} parent=0 // pred_check_branch
    %17 = sbr.rel (0) target = $region5
  $region4: #{_lambda_.1} parent=0 // pred_region
    _
  $region5: #{_lambda_.1} parent=0 // pred_fallthru
    _
  // Predicated region
  $region6: #{_lambda_.1} parent=0 // pred_check
    _
  $region7: #{_lambda_.1} parent=0 // pred_check_branch
    %19 = sbr.rel (0) target = $region9
  $region8: #{_lambda_.1} parent=0 // pred_region
    _
  $region9: #{_lambda_.1} parent=0 // pred_fallthru
    _
  // Predicated region
  $region10: #{_lambda_.1} parent=0 // pred_check
    _
  $region11: #{_lambda_.1} parent=0 // pred_check_branch
    %21 = sbr.rel (0) target = $region13
  $region12: #{_lambda_.1} parent=0 // pred_region
    _
  $region13: #{_lambda_.1} parent=0 // pred_fallthru
    _
  // Predicated region
  $region14: #{_lambda_.1} parent=0 // pred_check
    _
  $region15: #{_lambda_.1} parent=0 // pred_check_branch
    %23 = sbr.rel (0) target = $region17
  $region16: #{_lambda_.1} parent=0 // pred_region
    _
  $region17: #{_lambda_.1} parent=0 // pred_fallthru
    _
  // Predicated region
  $region18: #{_lambda_.1} parent=0 // pred_check
    _
  $region19: #{_lambda_.1} parent=0 // pred_check_branch
    %25 = sbr.rel (0) target = $region21
  $region20: #{_lambda_.1} parent=0 // pred_region
    _
  $region21: #{_lambda_.1} parent=0 // pred_fallthru
    _
  // Predicated region
  $region22: #{_lambda_.1} parent=0 // pred_check
    _
  $region23: #{_lambda_.1} parent=0 // pred_check_branch
    %27 = sbr.rel (0) target = $region25
  $region24: #{_lambda_.1} parent=0 // pred_region
    _
  $region25: #{_lambda_.1} parent=0 // pred_fallthru
    _
  // Predicated region
  $region26: #{_lambda_.1} parent=0 // pred_check
    _
  $region27: #{_lambda_.1} parent=0 // pred_check_branch
    %29 = sbr.rel (0) target = $region29
  $region28: #{_lambda_.1} parent=0 // pred_region
    _
  $region29: #{_lambda_.1} parent=0 // pred_fallthru
    _
  // Predicated region
  $region30: #{_lambda_.1} parent=0 // pred_check
    _
  $region31: #{_lambda_.1} parent=0 // pred_check_branch
    %31 = sbr.rel (0) target = $region33
  $region32: #{_lambda_.1} parent=0 // pred_region
    _
  $region33: #{_lambda_.1} parent=0 // pred_fallthru
    _
  // Predicated region
  $region34: #{_lambda_.1} parent=0 // pred_check
    _
  $region35: #{_lambda_.1} parent=0 // pred_check_branch
    %33 = sbr.rel (0) target = $region37
  $region36: #{_lambda_.1} parent=0 // pred_region
    _
  $region37: #{_lambda_.1} parent=0 // pred_fallthru
    _
  %v35 = vld [vmem:[%s1] sm:$0xf]
  %v36 = vld [vmem:[%s1 + $0x4] sm:$0xf]
  %v37 = vld [vmem:[%s1 + $0x8] sm:$0xf]
  %v38 = vld [vmem:[%s1 + $0xc] sm:$0xf]
  %v39 = vld [vmem:[%s1 + $0x10] sm:$0xf]
  %v40 = vld [vmem:[%s1 + $0x14] sm:$0xf]
  %v41 = vld [vmem:[%s1 + $0x18] sm:$0xf]
  %v42 = vld [vmem:[%s1 + $0x1c] sm:$0xf]
  %v43 = vld [vmem:[%s0] sm:$0xf]
  %v44 = vld [vmem:[%s0 + $0x4] sm:$0xf]
  %v45 = vld [vmem:[%s0 + $0x8] sm:$0xf]
  %v46 = vld [vmem:[%s0 + $0xc] sm:$0xf]
  %v47 = vld [vmem:[%s0 + $0x10] sm:$0xf]
  %v48 = vld [vmem:[%s0 + $0x14] sm:$0xf]
  %v49 = vld [vmem:[%s0 + $0x18] sm:$0xf]
  %v50 = vld [vmem:[%s0 + $0x1c] sm:$0xf]
  %v51 = vld [vmem:[%s0 + $0x20] sm:$0xf]
  %v52 = vld [vmem:[%s0 + $0x24] sm:$0xf]
  %v53 = vld [vmem:[%s0 + $0x28] sm:$0xf]
  %v54 = vld [vmem:[%s0 + $0x2c] sm:$0xf]
  %v55 = vld [vmem:[%s0 + $0x30] sm:$0xf]
  %v56 = vld [vmem:[%s0 + $0x34] sm:$0xf]
  %v57 = vld [vmem:[%s0 + $0x38] sm:$0xf]
  %v58 = vld [vmem:[%s0 + $0x3c] sm:$0xf]
  %v59 = vld [vmem:[%s0 + $0x40] sm:$0xf]
  %v60 = vld [vmem:[%s0 + $0x44] sm:$0xf]
  %v61 = vld [vmem:[%s0 + $0x48] sm:$0xf]
  %v62 = vld [vmem:[%s0 + $0x4c] sm:$0xf]
  %v63 = vld [vmem:[%s0 + $0x50] sm:$0xf]
  %v64 = vld [vmem:[%s0 + $0x54] sm:$0xf]
  %v65 = vld [vmem:[%s0 + $0x58] sm:$0xf]
  %v66 = vld [vmem:[%s0 + $0x5c] sm:$0xf]
  %v67 = vld [vmem:[%s0 + $0x60] sm:$0xf]
  %v68 = vld [vmem:[%s0 + $0x64] sm:$0xf]
  %v69 = vld [vmem:[%s0 + $0x68] sm:$0xf]
  %v70 = vld [vmem:[%s0 + $0x6c] sm:$0xf]
  %v71 = vld [vmem:[%s0 + $0x70] sm:$0xf]
  %v72 = vld [vmem:[%s0 + $0x74] sm:$0xf]
  %v73 = vld [vmem:[%s0 + $0x78] sm:$0xf]
  %v74 = vld [vmem:[%s0 + $0x7c] sm:$0xf]
  %v75 = vld [vmem:[%s0 + $0x80] sm:$0xf]
  %v76 = vld [vmem:[%s0 + $0x84] sm:$0xf]
  %v77 = vld [vmem:[%s0 + $0x88] sm:$0xf]
  %v78 = vld [vmem:[%s0 + $0x8c] sm:$0xf]
  %v79 = vld [vmem:[%s0 + $0x90] sm:$0xf]
  %v80 = vld [vmem:[%s0 + $0x94] sm:$0xf]
  %v81 = vld [vmem:[%s0 + $0x98] sm:$0xf]
  %v82 = vld [vmem:[%s0 + $0x9c] sm:$0xf]
  %v83 = vld [vmem:[%s0 + $0xa0] sm:$0xf]
  %v84 = vld [vmem:[%s0 + $0xa4] sm:$0xf]
  %v85 = vld [vmem:[%s0 + $0xa8] sm:$0xf]
  %v86 = vld [vmem:[%s0 + $0xac] sm:$0xf]
  %v87 = vld [vmem:[%s0 + $0xb0] sm:$0xf]
  %v88 = vld [vmem:[%s0 + $0xb4] sm:$0xf]
  %v89 = vld [vmem:[%s0 + $0xb8] sm:$0xf]
  %v90 = vld [vmem:[%s0 + $0xbc] sm:$0xf]
  %v91 = vld [vmem:[%s2] sm:$0xff]
  %v92 = vld [vmem:[%s2 + $0x8] sm:$0xff]
  %v93 = vld [vmem:[%s2 + $0x10] sm:$0xff]
  %v94 = vld [vmem:[%s2 + $0x18] sm:$0xff]
  %v95 = vld [vmem:[%s2 + $0x20] sm:$0xff]
  %v96 = vld [vmem:[%s2 + $0x28] sm:$0xff]
  %v97 = vld [vmem:[%s2 + $0x30] sm:$0xff]
  %v98 = vld [vmem:[%s2 + $0x38] sm:$0xff]
  %100 = vset.pattern.permute.xlu0 0
  %101 = vperm.xlu0 %100, %v91
  %v102 = vpop.permute.xlu0 %101
  %105 = vset.pattern.permute.xlu0 0
  %106 = vperm.xlu0 %105, %v92
  %v107 = vpop.permute.xlu0 %106
  %110 = vset.pattern.permute.xlu0 0
  %111 = vperm.xlu0 %110, %v93
  %v112 = vpop.permute.xlu0 %111
  %115 = vset.pattern.permute.xlu0 0
  %116 = vperm.xlu0 %115, %v94
  %v117 = vpop.permute.xlu0 %116
  %120 = vset.pattern.permute.xlu0 0
  %121 = vperm.xlu0 %120, %v95
  %v122 = vpop.permute.xlu0 %121
  %125 = vset.pattern.permute.xlu0 0
  %126 = vperm.xlu0 %125, %v96
  %v127 = vpop.permute.xlu0 %126
  %130 = vset.pattern.permute.xlu0 0
  %131 = vperm.xlu0 %130, %v97
  %v132 = vpop.permute.xlu0 %131
  %135 = vset.pattern.permute.xlu0 0
  %136 = vperm.xlu0 %135, %v98
  %v137 = vpop.permute.xlu0 %136
  %v147 = vunpack.c.l.b16 %v35
  %v148 = vunpack.c.l.b16 %v36
  %v149 = vunpack.c.l.b16 %v37
  %v150 = vunpack.c.l.b16 %v38
  %v151 = vunpack.c.l.b16 %v39
  %v152 = vunpack.c.l.b16 %v40
  %v153 = vunpack.c.l.b16 %v41
  %v154 = vunpack.c.l.b16 %v42
  %v155 = vpack.c.b16 %v148, %v147
  %v156 = vpack.c.b16 %v150, %v149
  %v157 = vpack.c.b16 %v152, %v151
  %v158 = vpack.c.b16 %v154, %v153
  %v207 = vunpack.c.l.b16 %v43
  %v208 = vunpack.c.l.b16 %v44
  %v209 = vunpack.c.l.b16 %v45
  %v210 = vunpack.c.l.b16 %v46
  %v211 = vunpack.c.l.b16 %v47
  %v212 = vunpack.c.l.b16 %v48
  %v213 = vunpack.c.l.b16 %v49
  %v214 = vunpack.c.l.b16 %v50
  %v215 = vunpack.c.l.b16 %v51
  %v216 = vunpack.c.l.b16 %v52
  %v217 = vunpack.c.l.b16 %v53
  %v218 = vunpack.c.l.b16 %v54
  %v219 = vunpack.c.l.b16 %v55
  %v220 = vunpack.c.l.b16 %v56
  %v221 = vunpack.c.l.b16 %v57
  %v222 = vunpack.c.l.b16 %v58
  %v223 = vunpack.c.l.b16 %v59
  %v224 = vunpack.c.l.b16 %v60
  %v225 = vunpack.c.l.b16 %v61
  %v226 = vunpack.c.l.b16 %v62
  %v227 = vunpack.c.l.b16 %v63
  %v228 = vunpack.c.l.b16 %v64
  %v229 = vunpack.c.l.b16 %v65
  %v230 = vunpack.c.l.b16 %v66
  %v231 = vunpack.c.l.b16 %v67
  %v232 = vunpack.c.l.b16 %v68
  %v233 = vunpack.c.l.b16 %v69
  %v234 = vunpack.c.l.b16 %v70
  %v235 = vunpack.c.l.b16 %v71
  %v236 = vunpack.c.l.b16 %v72
  %v237 = vunpack.c.l.b16 %v73
  %v238 = vunpack.c.l.b16 %v74
  %v239 = vunpack.c.l.b16 %v75
  %v240 = vunpack.c.l.b16 %v76
  %v241 = vunpack.c.l.b16 %v77
  %v242 = vunpack.c.l.b16 %v78
  %v243 = vunpack.c.l.b16 %v79
  %v244 = vunpack.c.l.b16 %v80
  %v245 = vunpack.c.l.b16 %v81
  %v246 = vunpack.c.l.b16 %v82
  %v247 = vunpack.c.l.b16 %v83
  %v248 = vunpack.c.l.b16 %v84
  %v249 = vunpack.c.l.b16 %v85
  %v250 = vunpack.c.l.b16 %v86
  %v251 = vunpack.c.l.b16 %v87
  %v252 = vunpack.c.l.b16 %v88
  %v253 = vunpack.c.l.b16 %v89
  %v254 = vunpack.c.l.b16 %v90
  %v255 = vpack.c.b16 %v208, %v207
  %v256 = vpack.c.b16 %v210, %v209
  %v257 = vpack.c.b16 %v212, %v211
  %v258 = vpack.c.b16 %v214, %v213
  %v259 = vpack.c.b16 %v216, %v215
  %v260 = vpack.c.b16 %v218, %v217
  %v261 = vpack.c.b16 %v220, %v219
  %v262 = vpack.c.b16 %v222, %v221
  %v263 = vpack.c.b16 %v224, %v223
  %v264 = vpack.c.b16 %v226, %v225
  %v265 = vpack.c.b16 %v228, %v227
  %v266 = vpack.c.b16 %v230, %v229
  %v267 = vpack.c.b16 %v232, %v231
  %v268 = vpack.c.b16 %v234, %v233
  %v269 = vpack.c.b16 %v236, %v235
  %v270 = vpack.c.b16 %v238, %v237
  %v271 = vpack.c.b16 %v240, %v239
  %v272 = vpack.c.b16 %v242, %v241
  %v273 = vpack.c.b16 %v244, %v243
  %v274 = vpack.c.b16 %v246, %v245
  %v275 = vpack.c.b16 %v248, %v247
  %v276 = vpack.c.b16 %v250, %v249
  %v277 = vpack.c.b16 %v252, %v251
  %v278 = vpack.c.b16 %v254, %v253
  %vm279 = vcmask 261120
  %v281 = vsel %vm279, %v155, 0
  %v284 = vsel %vm279, %v156, 0
  %v287 = vsel %vm279, %v157, 0
  %v290 = vsel %vm279, %v158, 0
  %v293 = vsel %vm279, %v255, 0
  %v296 = vsel %vm279, %v256, 0
  %v299 = vsel %vm279, %v257, 0
  %v302 = vsel %vm279, %v258, 0
  %v305 = vsel %vm279, %v259, 0
  %v308 = vsel %vm279, %v260, 0
  %v311 = vsel %vm279, %v261, 0
  %v314 = vsel %vm279, %v262, 0
  %v317 = vsel %vm279, %v263, 0
  %v320 = vsel %vm279, %v264, 0
  %v323 = vsel %vm279, %v265, 0
  %v326 = vsel %vm279, %v266, 0
  %v329 = vsel %vm279, %v267, 0
  %v332 = vsel %vm279, %v268, 0
  %v335 = vsel %vm279, %v269, 0
  %v338 = vsel %vm279, %v270, 0
  %v341 = vsel %vm279, %v271, 0
  %v344 = vsel %vm279, %v272, 0
  %v347 = vsel %vm279, %v273, 0
  %v350 = vsel %vm279, %v274, 0
  %v353 = vsel %vm279, %v275, 0
  %v356 = vsel %vm279, %v276, 0
  %v359 = vsel %vm279, %v277, 0
  %v362 = vsel %vm279, %v278, 0
  %364 = vmatpush.bf16.xpose.msra.mxu0 %v314
  %365 = vmatpush.bf16.xpose.msra.mxu0 %v311
  %366 = vmatpush.bf16.xpose.msra.mxu0 %v308
  %367 = vmatpush.bf16.xpose.msra.mxu0 %v305
  %368 = vmatpush.bf16.xpose.msra.mxu0 %v302
  %369 = vmatpush.bf16.xpose.msra.mxu0 %v299
  %370 = vmatpush.bf16.xpose.msra.mxu0 %v296
  %371 = vmatpush.bf16.xpose.msra.mxu0 %v293
  %372 = vmatmul.bf16.gmra.mxu0 %v281
  %v373 = vpop.f32.mrf.mxu0
  %v374 = vadd.f32 %v102, %v373
  %v375 = vpop.f32.mrf.mxu0
  %v376 = vadd.f32 %v107, %v375
  %377 = vmatmul.bf16.gmra.mxu0 %v284
  %v378 = vpop.f32.mrf.mxu0
  %v379 = vadd.f32 %v112, %v378
  %v380 = vpop.f32.mrf.mxu0
  %v381 = vadd.f32 %v117, %v380
  %382 = vmatmul.bf16.gmra.mxu0 %v287
  %v383 = vpop.f32.mrf.mxu0
  %v384 = vadd.f32 %v122, %v383
  %v385 = vpop.f32.mrf.mxu0
  %v386 = vadd.f32 %v127, %v385
  %387 = vmatmul.bf16.gmra.mxu0 %v290
  %v388 = vpop.f32.mrf.mxu0
  %v389 = vadd.f32 %v132, %v388
  %v390 = vpop.f32.mrf.mxu0
  %v391 = vadd.f32 %v137, %v390
  %392 = vdwg.mxu0
  %393 = vmatpush.bf16.xpose.msra.mxu0 %v338
  %394 = vmatpush.bf16.xpose.msra.mxu0 %v335
  %395 = vmatpush.bf16.xpose.msra.mxu0 %v332
  %396 = vmatpush.bf16.xpose.msra.mxu0 %v329
  %397 = vmatpush.bf16.xpose.msra.mxu0 %v326
  %398 = vmatpush.bf16.xpose.msra.mxu0 %v323
  %399 = vmatpush.bf16.xpose.msra.mxu0 %v320
  %400 = vmatpush.bf16.xpose.msra.mxu0 %v317
  %401 = vmatmul.bf16.gmra.mxu0 %v281
  %v402 = vpop.f32.mrf.mxu0
  %v403 = vadd.f32 %v102, %v402
  %v404 = vpop.f32.mrf.mxu0
  %v405 = vadd.f32 %v107, %v404
  %406 = vmatmul.bf16.gmra.mxu0 %v284
  %v407 = vpop.f32.mrf.mxu0
  %v408 = vadd.f32 %v112, %v407
  %v409 = vpop.f32.mrf.mxu0
  %v410 = vadd.f32 %v117, %v409
  %411 = vmatmul.bf16.gmra.mxu0 %v287
  %v412 = vpop.f32.mrf.mxu0
  %v413 = vadd.f32 %v122, %v412
  %v414 = vpop.f32.mrf.mxu0
  %v415 = vadd.f32 %v127, %v414
  %416 = vmatmul.bf16.gmra.mxu0 %v290
  %v417 = vpop.f32.mrf.mxu0
  %v418 = vadd.f32 %v132, %v417
  %v419 = vpop.f32.mrf.mxu0
  %v420 = vadd.f32 %v137, %v419
  %421 = vdwg.mxu0
  %422 = vmatpush.bf16.xpose.msra.mxu0 %v362
  %423 = vmatpush.bf16.xpose.msra.mxu0 %v359
  %424 = vmatpush.bf16.xpose.msra.mxu0 %v356
  %425 = vmatpush.bf16.xpose.msra.mxu0 %v353
  %426 = vmatpush.bf16.xpose.msra.mxu0 %v350
  %427 = vmatpush.bf16.xpose.msra.mxu0 %v347
  %428 = vmatpush.bf16.xpose.msra.mxu0 %v344
  %429 = vmatpush.bf16.xpose.msra.mxu0 %v341
  %430 = vmatmul.bf16.gmra.mxu0 %v281
  %v431 = vpop.f32.mrf.mxu0
  %v432 = vadd.f32 %v102, %v431
  %v433 = vpop.f32.mrf.mxu0
  %v434 = vadd.f32 %v107, %v433
  %435 = vmatmul.bf16.gmra.mxu0 %v284
  %v436 = vpop.f32.mrf.mxu0
  %v437 = vadd.f32 %v112, %v436
  %v438 = vpop.f32.mrf.mxu0
  %v439 = vadd.f32 %v117, %v438
  %440 = vmatmul.bf16.gmra.mxu0 %v287
  %v441 = vpop.f32.mrf.mxu0
  %v442 = vadd.f32 %v122, %v441
  %v443 = vpop.f32.mrf.mxu0
  %v444 = vadd.f32 %v127, %v443
  %445 = vmatmul.bf16.gmra.mxu0 %v290
  %v446 = vpop.f32.mrf.mxu0
  %v447 = vadd.f32 %v132, %v446
  %v448 = vpop.f32.mrf.mxu0
  %v449 = vadd.f32 %v137, %v448
  %450 = vdwg.mxu0
  %v451 = vmax.f32 %v374, 0.0
  %v452 = vmax.f32 %v403, 0.0
  %v453 = vmax.f32 %v432, 0.0
  %v454 = vmax.f32 %v376, 0.0
  %v455 = vmax.f32 %v405, 0.0
  %v456 = vmax.f32 %v434, 0.0
  %v457 = vmax.f32 %v379, 0.0
  %v458 = vmax.f32 %v408, 0.0
  %v459 = vmax.f32 %v437, 0.0
  %v460 = vmax.f32 %v381, 0.0
  %v461 = vmax.f32 %v410, 0.0
  %v462 = vmax.f32 %v439, 0.0
  %v463 = vmax.f32 %v384, 0.0
  %v464 = vmax.f32 %v413, 0.0
  %v465 = vmax.f32 %v442, 0.0
  %v466 = vmax.f32 %v386, 0.0
  %v467 = vmax.f32 %v415, 0.0
  %v468 = vmax.f32 %v444, 0.0
  %v469 = vmax.f32 %v389, 0.0
  %v470 = vmax.f32 %v418, 0.0
  %v471 = vmax.f32 %v447, 0.0
  %v472 = vmax.f32 %v391, 0.0
  %v473 = vmax.f32 %v420, 0.0
  %v474 = vmax.f32 %v449, 0.0
  %v475 = vld [vmem:[%s3] sm:$0xf]
  %v476 = vld [vmem:[%s3 + $0x4] sm:$0xf]
  %v477 = vld [vmem:[%s3 + $0x8] sm:$0xf]
  %v478 = vld [vmem:[%s3 + $0xc] sm:$0xf]
  %v479 = vld [vmem:[%s3 + $0x10] sm:$0xf]
  %v480 = vld [vmem:[%s3 + $0x14] sm:$0xf]
  %v481 = vld [vmem:[%s3 + $0x18] sm:$0xf]
  %v482 = vld [vmem:[%s3 + $0x1c] sm:$0xf]
  %v483 = vpack.c.bf16 %v454, %v451
  %v484 = vpack.c.bf16 %v455, %v452
  %v485 = vpack.c.bf16 %v456, %v453
  %v486 = vpack.c.bf16 %v460, %v457
  %v487 = vpack.c.bf16 %v461, %v458
  %v488 = vpack.c.bf16 %v462, %v459
  %v489 = vpack.c.bf16 %v466, %v463
  %v490 = vpack.c.bf16 %v467, %v464
  %v491 = vpack.c.bf16 %v468, %v465
  %v492 = vpack.c.bf16 %v472, %v469
  %v493 = vpack.c.bf16 %v473, %v470
  %v494 = vpack.c.bf16 %v474, %v471
  %v495 = vld [vmem:[%s4] sm:$0xff]
  %v496 = vld [vmem:[%s4 + $0x8] sm:$0xff]
  %v497 = vld [vmem:[%s4 + $0x10] sm:$0xff]
  %v498 = vld [vmem:[%s4 + $0x18] sm:$0xff]
  %v499 = vld [vmem:[%s4 + $0x20] sm:$0xff]
  %v500 = vld [vmem:[%s4 + $0x28] sm:$0xff]
  %v501 = vld [vmem:[%s4 + $0x30] sm:$0xff]
  %v502 = vld [vmem:[%s4 + $0x38] sm:$0xff]
  %504 = vset.pattern.permute.xlu0 0
  %505 = vperm.xlu0 %504, %v495
  %v506 = vpop.permute.xlu0 %505
  %509 = vset.pattern.permute.xlu0 0
  %510 = vperm.xlu0 %509, %v496
  %v511 = vpop.permute.xlu0 %510
  %514 = vset.pattern.permute.xlu0 0
  %515 = vperm.xlu0 %514, %v497
  %v516 = vpop.permute.xlu0 %515
  %519 = vset.pattern.permute.xlu0 0
  %520 = vperm.xlu0 %519, %v498
  %v521 = vpop.permute.xlu0 %520
  %524 = vset.pattern.permute.xlu0 0
  %525 = vperm.xlu0 %524, %v499
  %v526 = vpop.permute.xlu0 %525
  %529 = vset.pattern.permute.xlu0 0
  %530 = vperm.xlu0 %529, %v500
  %v531 = vpop.permute.xlu0 %530
  %534 = vset.pattern.permute.xlu0 0
  %535 = vperm.xlu0 %534, %v501
  %v536 = vpop.permute.xlu0 %535
  %539 = vset.pattern.permute.xlu0 0
  %540 = vperm.xlu0 %539, %v502
  %v541 = vpop.permute.xlu0 %540
  %v551 = vunpack.c.l.b16 %v475
  %v552 = vunpack.c.l.b16 %v476
  %v553 = vunpack.c.l.b16 %v477
  %v554 = vunpack.c.l.b16 %v478
  %v555 = vunpack.c.l.b16 %v479
  %v556 = vunpack.c.l.b16 %v480
  %v557 = vunpack.c.l.b16 %v481
  %v558 = vunpack.c.l.b16 %v482
  %v559 = vpack.c.b16 %v552, %v551
  %v560 = vpack.c.b16 %v554, %v553
  %v561 = vpack.c.b16 %v556, %v555
  %v562 = vpack.c.b16 %v558, %v557
  %vm563 = vcmask 523264
  %v565 = vsel %vm563, %v559, 0
  %v568 = vsel %vm563, %v560, 0
  %v571 = vsel %vm563, %v561, 0
  %v574 = vsel %vm563, %v562, 0
  %576 = vmatpush.bf16.msra.mxu0 0
  %577 = vmatpush.bf16.msra.mxu0 0
  %578 = vmatpush.bf16.msra.mxu0 0
  %579 = vmatpush.bf16.msra.mxu0 0
  %580 = vmatpush.bf16.msra.mxu0 %v492
  %581 = vmatpush.bf16.msra.mxu0 %v489
  %582 = vmatpush.bf16.msra.mxu0 %v486
  %583 = vmatpush.bf16.msra.mxu0 %v483
  %584 = vmatmul.bf16.gmra.mxu0 %v565
  %v585 = vpop.f32.mrf.mxu0
  %v586 = vadd.f32 %v506, %v585
  %v587 = vpop.f32.mrf.mxu0
  %v588 = vadd.f32 %v511, %v587
  %589 = vmatmul.bf16.gmra.mxu0 %v568
  %v590 = vpop.f32.mrf.mxu0
  %v591 = vadd.f32 %v516, %v590
  %v592 = vpop.f32.mrf.mxu0
  %v593 = vadd.f32 %v521, %v592
  %594 = vmatmul.bf16.gmra.mxu0 %v571
  %v595 = vpop.f32.mrf.mxu0
  %v596 = vadd.f32 %v526, %v595
  %v597 = vpop.f32.mrf.mxu0
  %v598 = vadd.f32 %v531, %v597
  %599 = vmatmul.bf16.gmra.mxu0 %v574
  %v600 = vpop.f32.mrf.mxu0
  %v601 = vadd.f32 %v536, %v600
  %v602 = vpop.f32.mrf.mxu0
  %v603 = vadd.f32 %v541, %v602
  %604 = vdwg.mxu0
  %605 = vmatpush.bf16.msra.mxu0 0
  %606 = vmatpush.bf16.msra.mxu0 0
  %607 = vmatpush.bf16.msra.mxu0 0
  %608 = vmatpush.bf16.msra.mxu0 0
  %609 = vmatpush.bf16.msra.mxu0 %v493
  %610 = vmatpush.bf16.msra.mxu0 %v490
  %611 = vmatpush.bf16.msra.mxu0 %v487
  %612 = vmatpush.bf16.msra.mxu0 %v484
  %613 = vmatmul.bf16.gmra.mxu0 %v565
  %v614 = vpop.f32.mrf.mxu0
  %v615 = vadd.f32 %v506, %v614
  %v616 = vpop.f32.mrf.mxu0
  %v617 = vadd.f32 %v511, %v616
  %618 = vmatmul.bf16.gmra.mxu0 %v568
  %v619 = vpop.f32.mrf.mxu0
  %v620 = vadd.f32 %v516, %v619
  %v621 = vpop.f32.mrf.mxu0
  %v622 = vadd.f32 %v521, %v621
  %623 = vmatmul.bf16.gmra.mxu0 %v571
  %v624 = vpop.f32.mrf.mxu0
  %v625 = vadd.f32 %v526, %v624
  %v626 = vpop.f32.mrf.mxu0
  %v627 = vadd.f32 %v531, %v626
  %628 = vmatmul.bf16.gmra.mxu0 %v574
  %v629 = vpop.f32.mrf.mxu0
  %v630 = vadd.f32 %v536, %v629
  %v631 = vpop.f32.mrf.mxu0
  %v632 = vadd.f32 %v541, %v631
  %633 = vdwg.mxu0
  %634 = vmatpush.bf16.msra.mxu0 0
  %635 = vmatpush.bf16.msra.mxu0 0
  %636 = vmatpush.bf16.msra.mxu0 0
  %637 = vmatpush.bf16.msra.mxu0 0
  %638 = vmatpush.bf16.msra.mxu0 %v494
  %639 = vmatpush.bf16.msra.mxu0 %v491
  %640 = vmatpush.bf16.msra.mxu0 %v488
  %641 = vmatpush.bf16.msra.mxu0 %v485
  %642 = vmatmul.bf16.gmra.mxu0 %v565
  %v643 = vpop.f32.mrf.mxu0
  %v644 = vadd.f32 %v506, %v643
  %v645 = vpop.f32.mrf.mxu0
  %v646 = vadd.f32 %v511, %v645
  %647 = vmatmul.bf16.gmra.mxu0 %v568
  %v648 = vpop.f32.mrf.mxu0
  %v649 = vadd.f32 %v516, %v648
  %v650 = vpop.f32.mrf.mxu0
  %v651 = vadd.f32 %v521, %v650
  %652 = vmatmul.bf16.gmra.mxu0 %v571
  %v653 = vpop.f32.mrf.mxu0
  %v654 = vadd.f32 %v526, %v653
  %v655 = vpop.f32.mrf.mxu0
  %v656 = vadd.f32 %v531, %v655
  %657 = vmatmul.bf16.gmra.mxu0 %v574
  %v658 = vpop.f32.mrf.mxu0
  %v659 = vadd.f32 %v536, %v658
  %v660 = vpop.f32.mrf.mxu0
  %v661 = vadd.f32 %v541, %v660
  %662 = vdwg.mxu0
  %v663 = vmax.f32 %v586, 0.0
  %v664 = vmax.f32 %v615, 0.0
  %v665 = vmax.f32 %v644, 0.0
  %v666 = vmax.f32 %v588, 0.0
  %v667 = vmax.f32 %v617, 0.0
  %v668 = vmax.f32 %v646, 0.0
  %v669 = vmax.f32 %v591, 0.0
  %v670 = vmax.f32 %v620, 0.0
  %v671 = vmax.f32 %v649, 0.0
  %v672 = vmax.f32 %v593, 0.0
  %v673 = vmax.f32 %v622, 0.0
  %v674 = vmax.f32 %v651, 0.0
  %v675 = vmax.f32 %v596, 0.0
  %v676 = vmax.f32 %v625, 0.0
  %v677 = vmax.f32 %v654, 0.0
  %v678 = vmax.f32 %v598, 0.0
  %v679 = vmax.f32 %v627, 0.0
  %v680 = vmax.f32 %v656, 0.0
  %v681 = vmax.f32 %v601, 0.0
  %v682 = vmax.f32 %v630, 0.0
  %v683 = vmax.f32 %v659, 0.0
  %v684 = vmax.f32 %v603, 0.0
  %v685 = vmax.f32 %v632, 0.0
  %v686 = vmax.f32 %v661, 0.0
  %v687 = vld [vmem:[%s5] sm:$0xf]
  %v688 = vld [vmem:[%s5 + $0x4] sm:$0xf]
  %v689 = vld [vmem:[%s5 + $0x8] sm:$0xf]
  %v690 = vld [vmem:[%s5 + $0xc] sm:$0xf]
  %v691 = vpack.c.bf16 %v666, %v663
  %v692 = vpack.c.bf16 %v667, %v664
  %v693 = vpack.c.bf16 %v668, %v665
  %v694 = vpack.c.bf16 %v672, %v669
  %v695 = vpack.c.bf16 %v673, %v670
  %v696 = vpack.c.bf16 %v674, %v671
  %v697 = vpack.c.bf16 %v678, %v675
  %v698 = vpack.c.bf16 %v679, %v676
  %v699 = vpack.c.bf16 %v680, %v677
  %v700 = vpack.c.bf16 %v684, %v681
  %v701 = vpack.c.bf16 %v685, %v682
  %v702 = vpack.c.bf16 %v686, %v683
  %v703 = vld [vmem:[%s6] sm:$0xff]
  %v704 = vld [vmem:[%s6 + $0x8] sm:$0xff]
  %v705 = vld [vmem:[%s6 + $0x10] sm:$0xff]
  %v706 = vld [vmem:[%s6 + $0x18] sm:$0xff]
  %708 = vset.pattern.permute.xlu0 0
  %709 = vperm.xlu0 %708, %v703
  %v710 = vpop.permute.xlu0 %709
  %713 = vset.pattern.permute.xlu0 0
  %714 = vperm.xlu0 %713, %v704
  %v715 = vpop.permute.xlu0 %714
  %718 = vset.pattern.permute.xlu0 0
  %719 = vperm.xlu0 %718, %v705
  %v720 = vpop.permute.xlu0 %719
  %723 = vset.pattern.permute.xlu0 0
  %724 = vperm.xlu0 %723, %v706
  %v725 = vpop.permute.xlu0 %724
  %v731 = vunpack.c.l.b16 %v687
  %v732 = vunpack.c.l.b16 %v688
  %v733 = vunpack.c.l.b16 %v689
  %v734 = vunpack.c.l.b16 %v690
  %v735 = vpack.c.b16 %v732, %v731
  %v736 = vpack.c.b16 %v734, %v733
  %v738 = vsel %vm563, %v735, 0
  %v741 = vsel %vm563, %v736, 0
  %743 = vmatpush.bf16.msra.mxu0 0
  %744 = vmatpush.bf16.msra.mxu0 0
  %745 = vmatpush.bf16.msra.mxu0 0
  %746 = vmatpush.bf16.msra.mxu0 0
  %747 = vmatpush.bf16.msra.mxu0 %v700
  %748 = vmatpush.bf16.msra.mxu0 %v697
  %749 = vmatpush.bf16.msra.mxu0 %v694
  %750 = vmatpush.bf16.msra.mxu0 %v691
  %751 = vmatmul.bf16.gmra.mxu0 %v738
  %v752 = vpop.f32.mrf.mxu0
  %v753 = vadd.f32 %v710, %v752
  %v754 = vpop.f32.mrf.mxu0
  %v755 = vadd.f32 %v715, %v754
  %756 = vmatmul.bf16.gmra.mxu0 %v741
  %v757 = vpop.f32.mrf.mxu0
  %v758 = vadd.f32 %v720, %v757
  %v759 = vpop.f32.mrf.mxu0
  %v760 = vadd.f32 %v725, %v759
  %761 = vdwg.mxu0
  %762 = vmatpush.bf16.msra.mxu0 0
  %763 = vmatpush.bf16.msra.mxu0 0
  %764 = vmatpush.bf16.msra.mxu0 0
  %765 = vmatpush.bf16.msra.mxu0 0
  %766 = vmatpush.bf16.msra.mxu0 %v701
  %767 = vmatpush.bf16.msra.mxu0 %v698
  %768 = vmatpush.bf16.msra.mxu0 %v695
  %769 = vmatpush.bf16.msra.mxu0 %v692
  %770 = vmatmul.bf16.gmra.mxu0 %v738
  %v771 = vpop.f32.mrf.mxu0
  %v772 = vadd.f32 %v710, %v771
  %v773 = vpop.f32.mrf.mxu0
  %v774 = vadd.f32 %v715, %v773
  %775 = vmatmul.bf16.gmra.mxu0 %v741
  %v776 = vpop.f32.mrf.mxu0
  %v777 = vadd.f32 %v720, %v776
  %v778 = vpop.f32.mrf.mxu0
  %v779 = vadd.f32 %v725, %v778
  %780 = vdwg.mxu0
  %781 = vmatpush.bf16.msra.mxu0 0
  %782 = vmatpush.bf16.msra.mxu0 0
  %783 = vmatpush.bf16.msra.mxu0 0
  %784 = vmatpush.bf16.msra.mxu0 0
  %785 = vmatpush.bf16.msra.mxu0 %v702
  %786 = vmatpush.bf16.msra.mxu0 %v699
  %787 = vmatpush.bf16.msra.mxu0 %v696
  %788 = vmatpush.bf16.msra.mxu0 %v693
  %789 = vmatmul.bf16.gmra.mxu0 %v738
  %v790 = vpop.f32.mrf.mxu0
  %v791 = vadd.f32 %v710, %v790
  %v792 = vpop.f32.mrf.mxu0
  %v793 = vadd.f32 %v715, %v792
  %794 = vmatmul.bf16.gmra.mxu0 %v741
  %v795 = vpop.f32.mrf.mxu0
  %v796 = vadd.f32 %v720, %v795
  %v797 = vpop.f32.mrf.mxu0
  %v798 = vadd.f32 %v725, %v797
  %799 = vdwg.mxu0
  %v800 = vmax.f32 %v753, 0.0
  %v801 = vmax.f32 %v772, 0.0
  %v802 = vmax.f32 %v791, 0.0
  %v803 = vmax.f32 %v755, 0.0
  %v804 = vmax.f32 %v774, 0.0
  %v805 = vmax.f32 %v793, 0.0
  %v806 = vmax.f32 %v758, 0.0
  %v807 = vmax.f32 %v777, 0.0
  %v808 = vmax.f32 %v796, 0.0
  %v809 = vmax.f32 %v760, 0.0
  %v810 = vmax.f32 %v779, 0.0
  %v811 = vmax.f32 %v798, 0.0
  %v812 = vld [vmem:[%s7] sm:$0xff]
  %v813 = vld [vmem:[%s7 + $0x8] sm:$0xff]
  %v814 = vld [vmem:[%s7 + $0x10] sm:$0xff]
  %v815 = vld [vmem:[%s7 + $0x18] sm:$0xff]
  %817 = vset.pattern.permute.xlu0 0
  %818 = vperm.xlu0 %817, %v812
  %v819 = vpop.permute.xlu0 %818
  %822 = vset.pattern.permute.xlu0 0
  %823 = vperm.xlu0 %822, %v813
  %v824 = vpop.permute.xlu0 %823
  %827 = vset.pattern.permute.xlu0 0
  %828 = vperm.xlu0 %827, %v814
  %v829 = vpop.permute.xlu0 %828
  %832 = vset.pattern.permute.xlu0 0
  %833 = vperm.xlu0 %832, %v815
  %v834 = vpop.permute.xlu0 %833
  %v836 = vmul.f32 %v800, %v819
  %v837 = vmul.f32 %v801, %v819
  %v838 = vmul.f32 %v802, %v819
  %v839 = vmul.f32 %v803, %v824
  %v840 = vmul.f32 %v804, %v824
  %v841 = vmul.f32 %v805, %v824
  %v842 = vmul.f32 %v806, %v829
  %v843 = vmul.f32 %v807, %v829
  %v844 = vmul.f32 %v808, %v829
  %v845 = vmul.f32 %v809, %v834
  %v846 = vmul.f32 %v810, %v834
  %v847 = vmul.f32 %v811, %v834
  %v848 = vadd.f32 %v836, %v839
  %v849 = vadd.f32 %v848, %v842
  %v850 = vadd.f32 %v849, %v845
  %v851 = vrot.slane %v850, 4
  %v852 = vadd.f32 %v850, %v851
  %v853 = vrot.slane %v852, 2
  %v854 = vadd.f32 %v852, %v853
  %v855 = vrot.slane %v854, 1
  %v856 = vadd.f32 %v854, %v855
  %v857 = vadd.f32 %v837, %v840
  %v858 = vadd.f32 %v857, %v843
  %v859 = vadd.f32 %v858, %v846
  %v860 = vrot.slane %v859, 4
  %v861 = vadd.f32 %v859, %v860
  %v862 = vrot.slane %v861, 2
  %v863 = vadd.f32 %v861, %v862
  %v864 = vrot.slane %v863, 1
  %v865 = vadd.f32 %v863, %v864
  %v866 = vadd.f32 %v838, %v841
  %v867 = vadd.f32 %v866, %v844
  %v868 = vadd.f32 %v867, %v847
  %v869 = vrot.slane %v868, 4
  %v870 = vadd.f32 %v868, %v869
  %v871 = vrot.slane %v870, 2
  %v872 = vadd.f32 %v870, %v871
  %v873 = vrot.slane %v872, 1
  %v874 = vadd.f32 %v872, %v873
  %v875 = vld [vmem:[#allocation2] sm:$0x1]
  %877 = vset.pattern.permute.xlu0 0
  %878 = vperm.xlu0 %877, %v875
  %v879 = vpop.permute.xlu0 %878
  %v881 = vperm.slane %v879, 0
  %v882 = vadd.f32 %v856, %v881
  %v883 = vadd.f32 %v865, %v881
  %v884 = vadd.f32 %v874, %v881
  %v888 = vrot.slane %v883, 7
  %v889 = vrot.slane %v884, 6
  %vm890 = vcmask 1040384
  %v891 = vsel %vm890, %v882, %v888
  %vm892 = vcmask 1041408
  %v893 = vsel %vm892, %v891, %v889
  %v895 = vlaneseq
  %vm896 = vcmp.ge.s32.totalorder %v895, 0
  %vm897 = vcmp.lt.s32.totalorder %v895, 384
  %vm898 = vmand %vm896, %vm897
  %899 = vst.msk [vmem:[%s9] sm:$0x7] %vm898, %v893
  // Predicated region
  $region38: #{_lambda_.1} parent=0 // pred_check
    _
  $region39: #{_lambda_.1} parent=0 // pred_check_branch
    %901 = sbr.rel (0) target = $region41
  $region40: #{_lambda_.1} parent=0 // pred_region
    _
  $region41: #{_lambda_.1} parent=0 // pred_fallthru
    _
  // Predicated region
  $region42: #{_lambda_.1} parent=0 // pred_check
    _
  $region43: #{_lambda_.1} parent=0 // pred_check_branch
    %903 = sbr.rel (0) target = $region45
  $region44: #{_lambda_.1} parent=0 // pred_region
    _
  $region45: #{_lambda_.1} parent=0 // pred_fallthru
    _

</llo_original>
